<compile_context>
chip_gen: v6e
topology: v6e:2x2x1
jax: 0.10.0
libtpu: 0.0.40
codegen_flags: <defaults>
</compile_context>

<pallas_src>
import jax
import jax.numpy as jnp
from jax.experimental import pallas as pl
from jax.experimental.pallas import tpu as pltpu


def _const_index_map(nd):
    # Weights use a constant block index so they stay resident in VMEM.
    return lambda b: (0,) * nd


def _vmem_capacity_bytes(default=64 << 20):
    """Per-core VMEM capacity; conservative 64 MiB (v7x) fallback."""
    try:
        cap = int(pltpu.get_tpu_info().vmem_capacity_bytes)
        if cap > 0:
            return cap
    except Exception:
        pass
    return default


def _select_batch_tile(B, N, wp_max, weight_bytes, vmem_cap, target_rows=4096):
    """Rows per grid step ~= target_rows, bounded by a VMEM working-set budget,
    and capped at B//2 so the grid has >= 2 steps (both v7x TCs get work)."""
    per_row = 12 * wp_max + 512            # ~ f32 act slabs + bf16 copy + ctx tile
    budget = int(vmem_cap * 0.45) - 2 * weight_bytes
    rows_cap = max(8, budget // per_row) if budget > per_row * 8 else 8
    rows = int(min(target_rows, rows_cap, B * N))
    b_tile = max(1, rows // max(N, 1))
    if B >= 2:
        b_tile = min(b_tile, B // 2)
    return max(1, b_tile)


def _make_encoder_kernel(n_linear, b_tile, n_pts):
    """MLP over a flattened (b_tile*N, in_dim) context slab + mean aggregation.

    Weight refs ordering: [W1, b1, W2, b2, ..., Wk, bk] (k = n_linear), weights
    bf16, biases f32.  Hidden dims may be zero-padded to >=128 (exact).
    """
    inv_n = 1.0 / float(n_pts)

    def kernel(ctx_ref, *rest):
        w_refs = rest[:-1]
        out_ref = rest[-1]

        # Layer 1 (+ReLU): (rows, in_dim) bf16 @ (in_dim, wp) bf16 -> f32 acc.
        h = jnp.dot(ctx_ref[...], w_refs[0][...], preferred_element_type=jnp.float32)
        h = jnp.maximum(h + w_refs[1][...], 0.0)

        # Hidden Linear+ReLU layers on the whole slab; re-cast to bf16 only at
        # the MXU input, bias/ReLU stay f32.
        for i in range(1, n_linear - 1):
            h = jnp.dot(h.astype(jnp.bfloat16), w_refs[2 * i][...],
                        preferred_element_type=jnp.float32)
            h = jnp.maximum(h + w_refs[2 * i + 1][...], 0.0)

        # Final Linear has no activation, so the mean over the N context points
        # commutes with it: reduce first (final matmul is N x smaller).
        wp = h.shape[-1]
        h_mean = jnp.sum(h.reshape(b_tile, n_pts, wp), axis=1) * inv_n
        out = jnp.dot(h_mean.astype(jnp.bfloat16), w_refs[2 * (n_linear - 1)][...],
                      preferred_element_type=jnp.float32)
        out = out + w_refs[2 * (n_linear - 1) + 1][...]
        out_ref[...] = out.astype(out_ref.dtype)

    return kernel


def _call_encoder(ctx_packed, weights, kernel, grid, b_tile, n_pts, in_dim,
                  out_dim, compiler_params, cost_estimate, use_buffered_weights):
    rows = b_tile * n_pts
    in_specs = [pl.BlockSpec((None, rows, in_dim), lambda b: (b, 0, 0))]
    for wgt in weights:
        if use_buffered_weights:
            spec = pl.BlockSpec(wgt.shape, _const_index_map(wgt.ndim),
                                pipeline_mode=pl.Buffered(1))
        else:
            spec = pl.BlockSpec(wgt.shape, _const_index_map(wgt.ndim))
        in_specs.append(spec)

    return pl.pallas_call(
        kernel,
        out_shape=jax.ShapeDtypeStruct((grid, b_tile, out_dim), jnp.float32),
        grid_spec=pltpu.PrefetchScalarGridSpec(
            num_scalar_prefetch=0,
            grid=(grid,),
            in_specs=in_specs,
            out_specs=pl.BlockSpec((None, b_tile, out_dim), lambda b: (b, 0, 0)),
        ),
        compiler_params=compiler_params,
        cost_estimate=cost_estimate,
    )(ctx_packed, *weights)


def deterministic_encoder(ctx_x, ctx_y, params, *, batch_tile=None, target_rows=4096):
    """params: flat list [W1, b1, ..., Wk, bk], W_i stored as (in, out), b_i (1, out)."""
    B, N, x_dim = ctx_x.shape
    _, _, y_dim = ctx_y.shape
    n_linear = len(params) // 2
    assert n_linear >= 2, "make_MLP always produces >= 2 Linear layers"

    dims = [params[0].shape[0]] + [params[2 * i].shape[1] for i in range(n_linear)]
    in_dim, out_dim = dims[0], dims[-1]
    assert in_dim == x_dim + y_dim, (in_dim, x_dim, y_dim)

    # Zero-pad hidden widths below 128 up to 128 (exact; lane-dense MXU/VPU).
    pdims = list(dims)
    for i in range(1, n_linear):
        if pdims[i] < 128:
            pdims[i] = 128

    weights = []
    weight_bytes = 0
    for i in range(n_linear):
        w, b = params[2 * i], params[2 * i + 1]
        wp_in, wp_out = pdims[i], pdims[i + 1]
        w_pad = jnp.zeros((wp_in, wp_out), jnp.float32).at[:w.shape[0], :w.shape[1]].set(w)
        b_pad = jnp.zeros((1, wp_out), jnp.float32).at[:, :b.shape[-1]].set(
            jnp.reshape(b, (1, -1)))
        weights.append(w_pad.astype(jnp.bfloat16))   # MXU operand in bf16
        weights.append(b_pad)                        # bias stays f32
        weight_bytes += wp_in * wp_out * 2 + wp_out * 4

    vmem_cap = _vmem_capacity_bytes()
    wp_max = max(pdims[1:])
    if batch_tile is None:
        batch_tile = _select_batch_tile(B, N, wp_max, weight_bytes, vmem_cap,
                                        target_rows)
    batch_tile = int(max(1, min(batch_tile, B)))
    grid = -(-B // batch_tile)                       # cdiv
    b_pad = grid * batch_tile

    # Pack (concat x/y), pad batch, cast and flatten in the wrapper so the
    # kernel does no relayout and each grid step streams one contiguous slab.
    ctx = jnp.concatenate([ctx_x, ctx_y], axis=-1)
    if b_pad > B:
        ctx = jnp.pad(ctx, ((0, b_pad - B), (0, 0), (0, 0)))
    ctx_packed = ctx.astype(jnp.bfloat16).reshape(grid, batch_tile * N, in_dim)

    flops = 2 * b_pad * N * sum(pdims[i] * pdims[i + 1] for i in range(n_linear - 1))
    flops += 2 * b_pad * pdims[-2] * pdims[-1]
    bytes_accessed = (int(ctx_packed.size) * 2
                      + sum(int(w.size) * w.dtype.itemsize for w in weights)
                      + b_pad * out_dim * 4)
    cost = pl.CostEstimate(flops=int(flops), transcendentals=0,
                           bytes_accessed=int(bytes_accessed))

    rows = batch_tile * N
    vmem_need = (3 * rows * wp_max * 4 + 2 * rows * 128 * 2
                 + 2 * weight_bytes + (2 << 20))
    vmem_limit = int(min(max(2 * vmem_need, 32 << 20), int(vmem_cap * 0.9)))
    compiler_params = pltpu.CompilerParams(
        dimension_semantics=("parallel",),
        vmem_limit_bytes=vmem_limit,
    )

    kernel = _make_encoder_kernel(n_linear, batch_tile, N)
    try:
        out = _call_encoder(ctx_packed, weights, kernel, grid, batch_tile, N,
                            in_dim, out_dim, compiler_params, cost,
                            use_buffered_weights=True)
    except Exception:
        # Older jax versions may reject pipeline_mode=pl.Buffered(1); retry with
        # default (double) buffering — correctness identical, slightly more VMEM.
        out = _call_encoder(ctx_packed, weights, kernel, grid, batch_tile, N,
                            in_dim, out_dim, compiler_params, cost,
                            use_buffered_weights=False)

    return out.reshape(b_pad, out_dim)[:B]           # (B, output_dim)


def init_mlp_params(key, n_layers, input_dim, output_dim, width):
    """Deterministic init matching make_MLP's Linear shapes (stored as (in, out))."""
    dims = [input_dim] + [width] * (n_layers - 1) + [output_dim]
    params = []
    for i in range(n_layers):
        key, kw, kb = jax.random.split(key, 3)
        fan_in = dims[i]
        bound = 1.0 / jnp.sqrt(jnp.float32(fan_in))
        w = jax.random.uniform(kw, (dims[i], dims[i + 1]), jnp.float32, -bound, bound)
        b = jax.random.uniform(kb, (1, dims[i + 1]), jnp.float32, -bound, bound)
        params += [w, b]
    return params


def _reference(ctx_x, ctx_y, params):
    h = jnp.concatenate([ctx_x, ctx_y], axis=-1)
    n_linear = len(params) // 2
    for i in range(n_linear):
        h = h @ params[2 * i] + params[2 * i + 1]
        if i < n_linear - 1:
            h = jnp.maximum(h, 0.0)
    return jnp.mean(h, axis=1)


if __name__ == "__main__":
    # Small shapes consistent with the module:
    #   ctx_x: (B, N, x_dim), ctx_y: (B, N, y_dim), input_dim = x_dim + y_dim
    B, N, x_dim, y_dim = 2, 8, 3, 1
    layers, width, output_dim = 3, 32, 32

    key = jax.random.PRNGKey(0)
    kx, ky, kp = jax.random.split(key, 3)
    ctx_x = jax.random.normal(kx, (B, N, x_dim), jnp.float32)
    ctx_y = jax.random.normal(ky, (B, N, y_dim), jnp.float32)
    params = init_mlp_params(kp, layers, x_dim + y_dim, output_dim, width)

    out = deterministic_encoder(ctx_x, ctx_y, params)
    out = jax.block_until_ready(out)

    ref = _reference(ctx_x, ctx_y, params)
    assert out.shape == (B, output_dim), out.shape
    # bf16 MXU inputs with f32 accumulation: tolerance loosened accordingly.
    assert jnp.allclose(out, ref, atol=5e-2, rtol=5e-2), "mismatch vs reference"

    print("KERNEL_OK")
</pallas_src>

<mosaic_0001>
module attributes {stable_mosaic.version = 11 : i64} {
  func.func @kernel(%arg0: i32, %arg1: memref<1x8x4xbf16, #tpu.memory_space<vmem>>, %arg2: memref<4x128xbf16, #tpu.memory_space<vmem>>, %arg3: memref<1x128xf32, #tpu.memory_space<vmem>>, %arg4: memref<128x128xbf16, #tpu.memory_space<vmem>>, %arg5: memref<1x128xf32, #tpu.memory_space<vmem>>, %arg6: memref<128x32xbf16, #tpu.memory_space<vmem>>, %arg7: memref<1x32xf32, #tpu.memory_space<vmem>>, %arg8: memref<1x1x32xf32, #tpu.memory_space<vmem>>) attributes {dimension_semantics = [#tpu.dimension_semantics<parallel>], iteration_bounds = array<i64: 2>, scalar_prefetch = 0 : i64, scratch_operands = 0 : i64, tpu.core_type = #tpu.core_type<tc>, window_params = [{transform_indices = @transform_0, window_bounds = array<i64: 1, 8, 4>}, {pipeline_mode = #tpu.pipeline_mode<synchronous>, transform_indices = @transform_1, window_bounds = array<i64: 4, 128>}, {pipeline_mode = #tpu.pipeline_mode<synchronous>, transform_indices = @transform_2, window_bounds = array<i64: 1, 128>}, {pipeline_mode = #tpu.pipeline_mode<synchronous>, transform_indices = @transform_3, window_bounds = array<i64: 128, 128>}, {pipeline_mode = #tpu.pipeline_mode<synchronous>, transform_indices = @transform_4, window_bounds = array<i64: 1, 128>}, {pipeline_mode = #tpu.pipeline_mode<synchronous>, transform_indices = @transform_5, window_bounds = array<i64: 128, 32>}, {pipeline_mode = #tpu.pipeline_mode<synchronous>, transform_indices = @transform_6, window_bounds = array<i64: 1, 32>}, {transform_indices = @transform_7, window_bounds = array<i64: 1, 1, 32>}]} {
    %c0 = arith.constant 0 : index
    %c0_0 = arith.constant 0 : index
    %c0_1 = arith.constant 0 : index
    %0 = vector.load %arg1[%c0, %c0_0, %c0_1] : memref<1x8x4xbf16, #tpu.memory_space<vmem>>, vector<1x8x4xbf16>
    %1 = vector.shape_cast %0 : vector<1x8x4xbf16> to vector<8x4xbf16>
    %c0_2 = arith.constant 0 : index
    %c0_3 = arith.constant 0 : index
    %2 = vector.load %arg2[%c0_2, %c0_3] : memref<4x128xbf16, #tpu.memory_space<vmem>>, vector<4x128xbf16>
    %cst = arith.constant dense<0.000000e+00> : vector<8x128xf32>
    %3 = tpu.matmul %1, %2, %cst {dimension_numbers = #tpu.dot_dimension_numbers<[1], [0], [0], [1], [0, 0, 1, 1], [], []>} : vector<8x4xbf16>, vector<4x128xbf16>, vector<8x128xf32> -> vector<8x128xf32>
    %c0_4 = arith.constant 0 : index
    %c0_5 = arith.constant 0 : index
    %4 = vector.load %arg3[%c0_4, %c0_5] : memref<1x128xf32, #tpu.memory_space<vmem>>, vector<1x128xf32>
    %5 = vector.broadcast %4 : vector<1x128xf32> to vector<8x128xf32>
    %6 = arith.addf %3, %5 : vector<8x128xf32>
    %cst_6 = arith.constant 0.000000e+00 : f32
    %7 = vector.broadcast %cst_6 : f32 to vector<8x128xf32>
    %8 = arith.maximumf %6, %7 : vector<8x128xf32>
    %9 = arith.truncf %8 : vector<8x128xf32> to vector<8x128xbf16>
    %c0_7 = arith.constant 0 : index
    %c0_8 = arith.constant 0 : index
    %10 = vector.load %arg4[%c0_7, %c0_8] : memref<128x128xbf16, #tpu.memory_space<vmem>>, vector<128x128xbf16>
    %cst_9 = arith.constant dense<0.000000e+00> : vector<8x128xf32>
    %11 = tpu.matmul %9, %10, %cst_9 {dimension_numbers = #tpu.dot_dimension_numbers<[1], [0], [0], [1], [0, 0, 1, 1], [], []>} : vector<8x128xbf16>, vector<128x128xbf16>, vector<8x128xf32> -> vector<8x128xf32>
    %c0_10 = arith.constant 0 : index
    %c0_11 = arith.constant 0 : index
    %12 = vector.load %arg5[%c0_10, %c0_11] : memref<1x128xf32, #tpu.memory_space<vmem>>, vector<1x128xf32>
    %13 = vector.broadcast %12 : vector<1x128xf32> to vector<8x128xf32>
    %14 = arith.addf %11, %13 : vector<8x128xf32>
    %cst_12 = arith.constant 0.000000e+00 : f32
    %15 = vector.broadcast %cst_12 : f32 to vector<8x128xf32>
    %16 = arith.maximumf %14, %15 : vector<8x128xf32>
    %17 = vector.shape_cast %16 : vector<8x128xf32> to vector<1x8x128xf32>
    %cst_13 = arith.constant dense<0.000000e+00> : vector<1x128xf32>
    %18 = vector.multi_reduction <add>, %17, %cst_13 [1] : vector<1x8x128xf32> to vector<1x128xf32>
    %cst_14 = arith.constant 1.250000e-01 : f32
    %19 = vector.broadcast %cst_14 : f32 to vector<1x128xf32>
    %20 = arith.mulf %18, %19 : vector<1x128xf32>
    %21 = arith.truncf %20 : vector<1x128xf32> to vector<1x128xbf16>
    %c0_15 = arith.constant 0 : index
    %c0_16 = arith.constant 0 : index
    %22 = vector.load %arg6[%c0_15, %c0_16] : memref<128x32xbf16, #tpu.memory_space<vmem>>, vector<128x32xbf16>
    %cst_17 = arith.constant dense<0.000000e+00> : vector<1x32xf32>
    %23 = tpu.matmul %21, %22, %cst_17 {dimension_numbers = #tpu.dot_dimension_numbers<[1], [0], [0], [1], [0, 0, 1, 1], [], []>} : vector<1x128xbf16>, vector<128x32xbf16>, vector<1x32xf32> -> vector<1x32xf32>
    %c0_18 = arith.constant 0 : index
    %c0_19 = arith.constant 0 : index
    %24 = vector.load %arg7[%c0_18, %c0_19] : memref<1x32xf32, #tpu.memory_space<vmem>>, vector<1x32xf32>
    %25 = arith.addf %23, %24 : vector<1x32xf32>
    %c0_20 = arith.constant 0 : index
    %c0_21 = arith.constant 0 : index
    %c0_22 = arith.constant 0 : index
    %26 = vector.load %arg8[%c0_20, %c0_21, %c0_22] : memref<1x1x32xf32, #tpu.memory_space<vmem>>, vector<1x1x32xf32>
    %27 = vector.shape_cast %26 : vector<1x1x32xf32> to vector<1x32xf32>
    %28 = vector.shape_cast %25 : vector<1x32xf32> to vector<1x1x32xf32>
    tpu.vector_store %arg8[%c0_20, %c0_21, %c0_22], %28 {strides = array<i32>} : memref<1x1x32xf32, #tpu.memory_space<vmem>>, vector<1x1x32xf32>,
    return
  }
  func.func @transform_0(%arg0: i32) -> (i32, i32, i32) {
    %c0_i32 = arith.constant 0 : i32
    %c0_i32_0 = arith.constant 0 : i32
    %c0_i32_1 = arith.constant 0 : i32
    return %arg0, %c0_i32, %c0_i32_0 : i32, i32, i32
  }
  func.func @transform_1(%arg0: i32) -> (i32, i32) {
    %c0_i32 = arith.constant 0 : i32
    %c0_i32_0 = arith.constant 0 : i32
    %c0_i32_1 = arith.constant 0 : i32
    return %c0_i32, %c0_i32_0 : i32, i32
  }
  func.func @transform_2(%arg0: i32) -> (i32, i32) {
    %c0_i32 = arith.constant 0 : i32
    %c0_i32_0 = arith.constant 0 : i32
    %c0_i32_1 = arith.constant 0 : i32
    return %c0_i32, %c0_i32_0 : i32, i32
  }
  func.func @transform_3(%arg0: i32) -> (i32, i32) {
    %c0_i32 = arith.constant 0 : i32
    %c0_i32_0 = arith.constant 0 : i32
    %c0_i32_1 = arith.constant 0 : i32
    return %c0_i32, %c0_i32_0 : i32, i32
  }
  func.func @transform_4(%arg0: i32) -> (i32, i32) {
    %c0_i32 = arith.constant 0 : i32
    %c0_i32_0 = arith.constant 0 : i32
    %c0_i32_1 = arith.constant 0 : i32
    return %c0_i32, %c0_i32_0 : i32, i32
  }
  func.func @transform_5(%arg0: i32) -> (i32, i32) {
    %c0_i32 = arith.constant 0 : i32
    %c0_i32_0 = arith.constant 0 : i32
    %c0_i32_1 = arith.constant 0 : i32
    return %c0_i32, %c0_i32_0 : i32, i32
  }
  func.func @transform_6(%arg0: i32) -> (i32, i32) {
    %c0_i32 = arith.constant 0 : i32
    %c0_i32_0 = arith.constant 0 : i32
    %c0_i32_1 = arith.constant 0 : i32
    return %c0_i32, %c0_i32_0 : i32, i32
  }
  func.func @transform_7(%arg0: i32) -> (i32, i32, i32) {
    %c0_i32 = arith.constant 0 : i32
    %c0_i32_0 = arith.constant 0 : i32
    %c0_i32_1 = arith.constant 0 : i32
    return %arg0, %c0_i32, %c0_i32_0 : i32, i32, i32
  }
}

module attributes {stable_mosaic.version = 11 : i64} {
  func.func @kernel(%arg0: i32, %arg1: memref<1x8x4xbf16, #tpu.memory_space<vmem>>, %arg2: memref<4x128xbf16, #tpu.memory_space<vmem>>, %arg3: memref<1x128xf32, #tpu.memory_space<vmem>>, %arg4: memref<128x128xbf16, #tpu.memory_space<vmem>>, %arg5: memref<1x128xf32, #tpu.memory_space<vmem>>, %arg6: memref<128x32xbf16, #tpu.memory_space<vmem>>, %arg7: memref<1x32xf32, #tpu.memory_space<vmem>>, %arg8: memref<1x1x32xf32, #tpu.memory_space<vmem>>) attributes {dimension_semantics = [#tpu.dimension_semantics<parallel>], iteration_bounds = array<i64: 2>, scalar_prefetch = 0 : i64, scratch_operands = 0 : i64, tpu.core_type = #tpu.core_type<tc>, window_params = [{transform_indices = @transform_0, window_bounds = array<i64: 1, 8, 4>}, {pipeline_mode = #tpu.pipeline_mode<synchronous>, transform_indices = @transform_1, window_bounds = array<i64: 4, 128>}, {pipeline_mode = #tpu.pipeline_mode<synchronous>, transform_indices = @transform_2, window_bounds = array<i64: 1, 128>}, {pipeline_mode = #tpu.pipeline_mode<synchronous>, transform_indices = @transform_3, window_bounds = array<i64: 128, 128>}, {pipeline_mode = #tpu.pipeline_mode<synchronous>, transform_indices = @transform_4, window_bounds = array<i64: 1, 128>}, {pipeline_mode = #tpu.pipeline_mode<synchronous>, transform_indices = @transform_5, window_bounds = array<i64: 128, 32>}, {pipeline_mode = #tpu.pipeline_mode<synchronous>, transform_indices = @transform_6, window_bounds = array<i64: 1, 32>}, {transform_indices = @transform_7, window_bounds = array<i64: 1, 1, 32>}]} {
    %c0 = arith.constant 0 : index
    %c0_0 = arith.constant 0 : index
    %c0_1 = arith.constant 0 : index
    %0 = vector.load %arg1[%c0, %c0_0, %c0_1] : memref<1x8x4xbf16, #tpu.memory_space<vmem>>, vector<1x8x4xbf16>
    %1 = vector.shape_cast %0 : vector<1x8x4xbf16> to vector<8x4xbf16>
    %c0_2 = arith.constant 0 : index
    %c0_3 = arith.constant 0 : index
    %2 = vector.load %arg2[%c0_2, %c0_3] : memref<4x128xbf16, #tpu.memory_space<vmem>>, vector<4x128xbf16>
    %cst = arith.constant dense<0.000000e+00> : vector<8x128xf32>
    %3 = tpu.matmul %1, %2, %cst {dimension_numbers = #tpu.dot_dimension_numbers<[1], [0], [0], [1], [0, 0, 1, 1], [], []>} : vector<8x4xbf16>, vector<4x128xbf16>, vector<8x128xf32> -> vector<8x128xf32>
    %c0_4 = arith.constant 0 : index
    %c0_5 = arith.constant 0 : index
    %4 = vector.load %arg3[%c0_4, %c0_5] : memref<1x128xf32, #tpu.memory_space<vmem>>, vector<1x128xf32>
    %5 = vector.broadcast %4 : vector<1x128xf32> to vector<8x128xf32>
    %6 = arith.addf %3, %5 : vector<8x128xf32>
    %cst_6 = arith.constant 0.000000e+00 : f32
    %7 = vector.broadcast %cst_6 : f32 to vector<8x128xf32>
    %8 = arith.maximumf %6, %7 : vector<8x128xf32>
    %9 = arith.truncf %8 : vector<8x128xf32> to vector<8x128xbf16>
    %c0_7 = arith.constant 0 : index
    %c0_8 = arith.constant 0 : index
    %10 = vector.load %arg4[%c0_7, %c0_8] : memref<128x128xbf16, #tpu.memory_space<vmem>>, vector<128x128xbf16>
    %cst_9 = arith.constant dense<0.000000e+00> : vector<8x128xf32>
    %11 = tpu.matmul %9, %10, %cst_9 {dimension_numbers = #tpu.dot_dimension_numbers<[1], [0], [0], [1], [0, 0, 1, 1], [], []>} : vector<8x128xbf16>, vector<128x128xbf16>, vector<8x128xf32> -> vector<8x128xf32>
    %c0_10 = arith.constant 0 : index
    %c0_11 = arith.constant 0 : index
    %12 = vector.load %arg5[%c0_10, %c0_11] : memref<1x128xf32, #tpu.memory_space<vmem>>, vector<1x128xf32>
    %13 = vector.broadcast %12 : vector<1x128xf32> to vector<8x128xf32>
    %14 = arith.addf %11, %13 : vector<8x128xf32>
    %cst_12 = arith.constant 0.000000e+00 : f32
    %15 = vector.broadcast %cst_12 : f32 to vector<8x128xf32>
    %16 = arith.maximumf %14, %15 : vector<8x128xf32>
    %17 = vector.shape_cast %16 : vector<8x128xf32> to vector<1x8x128xf32>
    %cst_13 = arith.constant dense<0.000000e+00> : vector<1x128xf32>
    %18 = vector.multi_reduction <add>, %17, %cst_13 [1] : vector<1x8x128xf32> to vector<1x128xf32>
    %cst_14 = arith.constant 1.250000e-01 : f32
    %19 = vector.broadcast %cst_14 : f32 to vector<1x128xf32>
    %20 = arith.mulf %18, %19 : vector<1x128xf32>
    %21 = arith.truncf %20 : vector<1x128xf32> to vector<1x128xbf16>
    %c0_15 = arith.constant 0 : index
    %c0_16 = arith.constant 0 : index
    %22 = vector.load %arg6[%c0_15, %c0_16] : memref<128x32xbf16, #tpu.memory_space<vmem>>, vector<128x32xbf16>
    %cst_17 = arith.constant dense<0.000000e+00> : vector<1x32xf32>
    %23 = tpu.matmul %21, %22, %cst_17 {dimension_numbers = #tpu.dot_dimension_numbers<[1], [0], [0], [1], [0, 0, 1, 1], [], []>} : vector<1x128xbf16>, vector<128x32xbf16>, vector<1x32xf32> -> vector<1x32xf32>
    %c0_18 = arith.constant 0 : index
    %c0_19 = arith.constant 0 : index
    %24 = vector.load %arg7[%c0_18, %c0_19] : memref<1x32xf32, #tpu.memory_space<vmem>>, vector<1x32xf32>
    %25 = arith.addf %23, %24 : vector<1x32xf32>
    %c0_20 = arith.constant 0 : index
    %c0_21 = arith.constant 0 : index
    %c0_22 = arith.constant 0 : index
    %26 = vector.load %arg8[%c0_20, %c0_21, %c0_22] : memref<1x1x32xf32, #tpu.memory_space<vmem>>, vector<1x1x32xf32>
    %27 = vector.shape_cast %26 : vector<1x1x32xf32> to vector<1x32xf32>
    %28 = vector.shape_cast %25 : vector<1x32xf32> to vector<1x1x32xf32>
    tpu.vector_store %arg8[%c0_20, %c0_21, %c0_22], %28 {strides = array<i32>} : memref<1x1x32xf32, #tpu.memory_space<vmem>>, vector<1x1x32xf32>,
    return
  }
  func.func @transform_0(%arg0: i32) -> (i32, i32, i32) {
    %c0_i32 = arith.constant 0 : i32
    %c0_i32_0 = arith.constant 0 : i32
    %c0_i32_1 = arith.constant 0 : i32
    return %arg0, %c0_i32, %c0_i32_0 : i32, i32, i32
  }
  func.func @transform_1(%arg0: i32) -> (i32, i32) {
    %c0_i32 = arith.constant 0 : i32
    %c0_i32_0 = arith.constant 0 : i32
    %c0_i32_1 = arith.constant 0 : i32
    return %c0_i32, %c0_i32_0 : i32, i32
  }
  func.func @transform_2(%arg0: i32) -> (i32, i32) {
    %c0_i32 = arith.constant 0 : i32
    %c0_i32_0 = arith.constant 0 : i32
    %c0_i32_1 = arith.constant 0 : i32
    return %c0_i32, %c0_i32_0 : i32, i32
  }
  func.func @transform_3(%arg0: i32) -> (i32, i32) {
    %c0_i32 = arith.constant 0 : i32
    %c0_i32_0 = arith.constant 0 : i32
    %c0_i32_1 = arith.constant 0 : i32
    return %c0_i32, %c0_i32_0 : i32, i32
  }
  func.func @transform_4(%arg0: i32) -> (i32, i32) {
    %c0_i32 = arith.constant 0 : i32
    %c0_i32_0 = arith.constant 0 : i32
    %c0_i32_1 = arith.constant 0 : i32
    return %c0_i32, %c0_i32_0 : i32, i32
  }
  func.func @transform_5(%arg0: i32) -> (i32, i32) {
    %c0_i32 = arith.constant 0 : i32
    %c0_i32_0 = arith.constant 0 : i32
    %c0_i32_1 = arith.constant 0 : i32
    return %c0_i32, %c0_i32_0 : i32, i32
  }
  func.func @transform_6(%arg0: i32) -> (i32, i32) {
    %c0_i32 = arith.constant 0 : i32
    %c0_i32_0 = arith.constant 0 : i32
    %c0_i32_1 = arith.constant 0 : i32
    return %c0_i32, %c0_i32_0 : i32, i32
  }
  func.func @transform_7(%arg0: i32) -> (i32, i32, i32) {
    %c0_i32 = arith.constant 0 : i32
    %c0_i32_0 = arith.constant 0 : i32
    %c0_i32_1 = arith.constant 0 : i32
    return %arg0, %c0_i32, %c0_i32_0 : i32, i32, i32
  }
}

</mosaic_0001>

<llo_original>
// kernel: tpu_custom_call.1
$region0: #{tpu_custom_call.1}
  #allocation0 [shape = 'u32[]', space=smem, size = 0x4, offset = 0x4, fixed_abs, tag = 'smem constant byte address 0x4 - core index']
  #allocation1 [shape = 'u32[144,128]{1,0:T(1,128)}', space=vmem, size = 0x12000, scoped, tag = 'internal scratch']
  %s0 = inlined_call_operand.vmem [shape: bf16[2,8,4], index: 0, kind: input, shape index: {}]
  %s1 = inlined_call_operand.vmem [shape: bf16[4,128], index: 1, kind: input, shape index: {}]
  %s2 = inlined_call_operand.vmem [shape: f32[1,128], index: 2, kind: input, shape index: {}]
  %s3 = inlined_call_operand.vmem [shape: bf16[128,128], index: 3, kind: input, shape index: {}]
  %s4 = inlined_call_operand.vmem [shape: f32[1,128], index: 4, kind: input, shape index: {}]
  %s5 = inlined_call_operand.vmem [shape: bf16[128,32], index: 5, kind: input, shape index: {}]
  %s6 = inlined_call_operand.vmem [shape: f32[1,32], index: 6, kind: input, shape index: {}]
  %s7 = inlined_call_operand.hbm [shape: f32[2,1,32], index: 7, kind: output, shape index: {}]
  %s8 = sld [smem:[#allocation0]]
  $region61: #{tpu_custom_call.1} parent=0
    _
  %s10 = ssub.s32 1, %s8
  %s11 = scalar_select 0, %s10, %s8
  $region1: #{tpu_custom_call.1} parent=0
    #allocation2 [shape = 'u8[1024]{0}', space=vmem, size = 0x400, scoped, tag = 'output window, operand 0']
    #allocation3 [shape = 's32[2]{0}', space=sflag, size = 0x8, scoped, tag = 'scoped memory for tpu_custom_call.1']
    %12 = vsyncpa [#allocation3], 0
    %s13 = scalar_lea.sflag [#allocation3], 1
    %14 = vsyncpa %s13, 0
    loop: start=0, step=1, limit=4
    $region2: #{tpu_custom_call.1} parent=1 // loop_pre_header
      _
    $region3: #{tpu_custom_call.1} parent=1 // loop_header
      %s16 = sphi 0, %s20
      %p17 = scmp.ge.s32.totalorder %s16, 4
      %s26 = sphi 0, %s28
      %s29 = sphi 0, %s26
      %s30 = sphi 0, %s29
      %s46 = sphi 0, %s30
      %s50 = sphi 0, %s50
      %s52 = sphi 0, %s50
      %s53 = sphi 0, %s52
      %s67 = sphi 0, %s53
      %s71 = sphi 0, %s71
      %s73 = sphi 0, %s71
      %s74 = sphi 0, %s73
      %s88 = sphi 0, %s74
      %s92 = sphi 0, %s92
      %s94 = sphi 0, %s92
      %s95 = sphi 0, %s94
      %s109 = sphi 0, %s95
      %s113 = sphi 0, %s113
      %s115 = sphi 0, %s113
      %s116 = sphi 0, %s115
      %s130 = sphi 0, %s116
      %s134 = sphi 0, %s134
      %s136 = sphi 0, %s134
      %s137 = sphi 0, %s136
      %s151 = sphi 0, %s137
      %s155 = sphi 0, %s155
      %s157 = sphi 0, %s155
      %s158 = sphi 0, %s157
      %s172 = sphi 0, %s158
      %s178 = sphi 0, %s180
      %s181 = sphi 0, %s178
      %s182 = sphi 0, %s181
      %s198 = sphi 0, %s182
    $region4: #{tpu_custom_call.1} parent=1 // loop_header_branch
      %19 = sbr.rel (%p17) target = $region8
    $region5: #{tpu_custom_call.1} parent=1 // loop_body
      %s21 = ssub.s32 %s16, 1
      %s22 = ssub.s32 %s16, 2
      %s23 = sadd.s32 %s16, 1
      %s24 = ssub.s32 %s16, %s23
      %p25 = scmp.eq.s32.totalorder %s24, 0
      %s27 = sadd.s32 %s26, 1
      %s28 = scalar_select %p25, %s26, %s27
      %p31 = pneg %p25
      %p32 = scmp.eq.s32.totalorder %s16, 1
      %p33 = por %p31, %p32
      %p34 = scmp.ne.s32.totalorder %s26, %s29
      %p35 = scmp.eq.s32.totalorder %s16, 0
      %p36 = por %p34, %p35
      %p37 = scmp.ne.s32.totalorder %s26, %s29
      %p38 = scmp.eq.s32.totalorder %s21, 1
      %p39 = por %p37, %p38
      %p40 = scmp.ne.s32.totalorder %s29, %s30
      %p41 = scmp.eq.s32.totalorder %s21, 0
      %p42 = por %p40, %p41
      %p43 = scmp.ne.s32.totalorder %s29, %s30
      %p44 = scmp.eq.s32.totalorder %s22, 1
      %p45 = por %p43, %p44
      %p47 = scmp.ne.s32.totalorder %s30, %s46
      %p48 = scmp.eq.s32.totalorder %s22, 0
      %p49 = por %p47, %p48
      %s51 = sadd.s32 %s50, 1
      %p54 = scmp.eq.s32.totalorder %s16, 1
      %p55 = scmp.ne.s32.totalorder %s50, %s52
      %p56 = scmp.eq.s32.totalorder %s16, 0
      %p57 = por %p55, %p56
      %p58 = scmp.ne.s32.totalorder %s50, %s52
      %p59 = scmp.eq.s32.totalorder %s21, 1
      %p60 = por %p58, %p59
      %p61 = scmp.ne.s32.totalorder %s52, %s53
      %p62 = scmp.eq.s32.totalorder %s21, 0
      %p63 = por %p61, %p62
      %p64 = scmp.ne.s32.totalorder %s52, %s53
      %p65 = scmp.eq.s32.totalorder %s22, 1
      %p66 = por %p64, %p65
      %p68 = scmp.ne.s32.totalorder %s53, %s67
      %p69 = scmp.eq.s32.totalorder %s22, 0
      %p70 = por %p68, %p69
      %s72 = sadd.s32 %s71, 1
      %p75 = scmp.eq.s32.totalorder %s16, 1
      %p76 = scmp.ne.s32.totalorder %s71, %s73
      %p77 = scmp.eq.s32.totalorder %s16, 0
      %p78 = por %p76, %p77
      %p79 = scmp.ne.s32.totalorder %s71, %s73
      %p80 = scmp.eq.s32.totalorder %s21, 1
      %p81 = por %p79, %p80
      %p82 = scmp.ne.s32.totalorder %s73, %s74
      %p83 = scmp.eq.s32.totalorder %s21, 0
      %p84 = por %p82, %p83
      %p85 = scmp.ne.s32.totalorder %s73, %s74
      %p86 = scmp.eq.s32.totalorder %s22, 1
      %p87 = por %p85, %p86
      %p89 = scmp.ne.s32.totalorder %s74, %s88
      %p90 = scmp.eq.s32.totalorder %s22, 0
      %p91 = por %p89, %p90
      %s93 = sadd.s32 %s92, 1
      %p96 = scmp.eq.s32.totalorder %s16, 1
      %p97 = scmp.ne.s32.totalorder %s92, %s94
      %p98 = scmp.eq.s32.totalorder %s16, 0
      %p99 = por %p97, %p98
      %p100 = scmp.ne.s32.totalorder %s92, %s94
      %p101 = scmp.eq.s32.totalorder %s21, 1
      %p102 = por %p100, %p101
      %p103 = scmp.ne.s32.totalorder %s94, %s95
      %p104 = scmp.eq.s32.totalorder %s21, 0
      %p105 = por %p103, %p104
      %p106 = scmp.ne.s32.totalorder %s94, %s95
      %p107 = scmp.eq.s32.totalorder %s22, 1
      %p108 = por %p106, %p107
      %p110 = scmp.ne.s32.totalorder %s95, %s109
      %p111 = scmp.eq.s32.totalorder %s22, 0
      %p112 = por %p110, %p111
      %s114 = sadd.s32 %s113, 1
      %p117 = scmp.eq.s32.totalorder %s16, 1
      %p118 = scmp.ne.s32.totalorder %s113, %s115
      %p119 = scmp.eq.s32.totalorder %s16, 0
      %p120 = por %p118, %p119
      %p121 = scmp.ne.s32.totalorder %s113, %s115
      %p122 = scmp.eq.s32.totalorder %s21, 1
      %p123 = por %p121, %p122
      %p124 = scmp.ne.s32.totalorder %s115, %s116
      %p125 = scmp.eq.s32.totalorder %s21, 0
      %p126 = por %p124, %p125
      %p127 = scmp.ne.s32.totalorder %s115, %s116
      %p128 = scmp.eq.s32.totalorder %s22, 1
      %p129 = por %p127, %p128
      %p131 = scmp.ne.s32.totalorder %s116, %s130
      %p132 = scmp.eq.s32.totalorder %s22, 0
      %p133 = por %p131, %p132
      %s135 = sadd.s32 %s134, 1
      %p138 = scmp.eq.s32.totalorder %s16, 1
      %p139 = scmp.ne.s32.totalorder %s134, %s136
      %p140 = scmp.eq.s32.totalorder %s16, 0
      %p141 = por %p139, %p140
      %p142 = scmp.ne.s32.totalorder %s134, %s136
      %p143 = scmp.eq.s32.totalorder %s21, 1
      %p144 = por %p142, %p143
      %p145 = scmp.ne.s32.totalorder %s136, %s137
      %p146 = scmp.eq.s32.totalorder %s21, 0
      %p147 = por %p145, %p146
      %p148 = scmp.ne.s32.totalorder %s136, %s137
      %p149 = scmp.eq.s32.totalorder %s22, 1
      %p150 = por %p148, %p149
      %p152 = scmp.ne.s32.totalorder %s137, %s151
      %p153 = scmp.eq.s32.totalorder %s22, 0
      %p154 = por %p152, %p153
      %s156 = sadd.s32 %s155, 1
      %p159 = scmp.eq.s32.totalorder %s16, 1
      %p160 = scmp.ne.s32.totalorder %s155, %s157
      %p161 = scmp.eq.s32.totalorder %s16, 0
      %p162 = por %p160, %p161
      %p163 = scmp.ne.s32.totalorder %s155, %s157
      %p164 = scmp.eq.s32.totalorder %s21, 1
      %p165 = por %p163, %p164
      %p166 = scmp.ne.s32.totalorder %s157, %s158
      %p167 = scmp.eq.s32.totalorder %s21, 0
      %p168 = por %p166, %p167
      %p169 = scmp.ne.s32.totalorder %s157, %s158
      %p170 = scmp.eq.s32.totalorder %s22, 1
      %p171 = por %p169, %p170
      %p173 = scmp.ne.s32.totalorder %s158, %s172
      %p174 = scmp.eq.s32.totalorder %s22, 0
      %p175 = por %p173, %p174
      %s176 = ssub.s32 %s16, %s23
      %p177 = scmp.eq.s32.totalorder %s176, 0
      %s179 = sadd.s32 %s178, 1
      %s180 = scalar_select %p177, %s178, %s179
      %p183 = pneg %p177
      %p184 = scmp.eq.s32.totalorder %s16, 1
      %p185 = por %p183, %p184
      %p186 = scmp.ne.s32.totalorder %s178, %s181
      %p187 = scmp.eq.s32.totalorder %s16, 0
      %p188 = por %p186, %p187
      %p189 = scmp.ne.s32.totalorder %s178, %s181
      %p190 = scmp.eq.s32.totalorder %s21, 1
      %p191 = por %p189, %p190
      %p192 = scmp.ne.s32.totalorder %s181, %s182
      %p193 = scmp.eq.s32.totalorder %s21, 0
      %p194 = por %p192, %p193
      %p195 = scmp.ne.s32.totalorder %s181, %s182
      %p196 = scmp.eq.s32.totalorder %s22, 1
      %p197 = por %p195, %p196
      %p199 = scmp.ne.s32.totalorder %s182, %s198
      %p200 = scmp.eq.s32.totalorder %s22, 0
      %p201 = por %p199, %p200
      %p202 = scmp.le.s32.totalorder 1, %s16
      %p203 = scmp.lt.s32.totalorder %s16, 3
      %p204 = pnand %p202, %p203
      %p205 = pneg %p204
      // Predicated region
      $region9: #{tpu_custom_call.1} parent=5 // pred_check
        _
      $region10: #{tpu_custom_call.1} parent=5 // pred_check_branch
        %207 = sbr.rel (%p204) target = $region12
      $region11: #{tpu_custom_call.1} parent=5 // pred_region
        %s208 = ssub.s32 %s16, 1
        // Predicated region
        $region13: #{tpu_custom_call.1} parent=11 // pred_check
          %p209 = pneg %p63
        $region14: #{tpu_custom_call.1} parent=11 // pred_check_branch
          %211 = sbr.rel (%p209) target = $region16
        $region15: #{tpu_custom_call.1} parent=11 // pred_region
          _
        $region16: #{tpu_custom_call.1} parent=11 // pred_fallthru
          _
        // Predicated region
        $region17: #{tpu_custom_call.1} parent=11 // pred_check
          %p212 = pneg %p84
        $region18: #{tpu_custom_call.1} parent=11 // pred_check_branch
          %214 = sbr.rel (%p212) target = $region20
        $region19: #{tpu_custom_call.1} parent=11 // pred_region
          _
        $region20: #{tpu_custom_call.1} parent=11 // pred_fallthru
          _
        // Predicated region
        $region21: #{tpu_custom_call.1} parent=11 // pred_check
          %p215 = pneg %p105
        $region22: #{tpu_custom_call.1} parent=11 // pred_check_branch
          %217 = sbr.rel (%p215) target = $region24
        $region23: #{tpu_custom_call.1} parent=11 // pred_region
          _
        $region24: #{tpu_custom_call.1} parent=11 // pred_fallthru
          _
        // Predicated region
        $region25: #{tpu_custom_call.1} parent=11 // pred_check
          %p218 = pneg %p126
        $region26: #{tpu_custom_call.1} parent=11 // pred_check_branch
          %220 = sbr.rel (%p218) target = $region28
        $region27: #{tpu_custom_call.1} parent=11 // pred_region
          _
        $region28: #{tpu_custom_call.1} parent=11 // pred_fallthru
          _
        // Predicated region
        $region29: #{tpu_custom_call.1} parent=11 // pred_check
          %p221 = pneg %p147
        $region30: #{tpu_custom_call.1} parent=11 // pred_check_branch
          %223 = sbr.rel (%p221) target = $region32
        $region31: #{tpu_custom_call.1} parent=11 // pred_region
          _
        $region32: #{tpu_custom_call.1} parent=11 // pred_fallthru
          _
        // Predicated region
        $region33: #{tpu_custom_call.1} parent=11 // pred_check
          %p224 = pneg %p168
        $region34: #{tpu_custom_call.1} parent=11 // pred_check_branch
          %226 = sbr.rel (%p224) target = $region36
        $region35: #{tpu_custom_call.1} parent=11 // pred_region
          _
        $region36: #{tpu_custom_call.1} parent=11 // pred_fallthru
          _
      $region12: #{tpu_custom_call.1} parent=5 // pred_fallthru
        _
      %p227 = scmp.lt.s32.totalorder %s16, 2
      // Predicated region
      $region37: #{tpu_custom_call.1} parent=5 // pred_check
        %p228 = pneg %p227
      $region38: #{tpu_custom_call.1} parent=5 // pred_check_branch
        %230 = sbr.rel (%p228) target = $region40
      $region39: #{tpu_custom_call.1} parent=5 // pred_region
        // Predicated region
        $region41: #{tpu_custom_call.1} parent=39 // pred_check
          %p231 = pneg %p36
        $region42: #{tpu_custom_call.1} parent=39 // pred_check_branch
          %233 = sbr.rel (%p231) target = $region44
        $region43: #{tpu_custom_call.1} parent=39 // pred_region
          %p234 = scmp.lt.s32.totalorder %s16, 1
          %s235 = scalar_select %p234, %s16, 1
          %s236 = smul.addr %s235, 4
          %s237 = scalar_lea.vmem %s0, %s236
        $region44: #{tpu_custom_call.1} parent=39 // pred_fallthru
          _
      $region40: #{tpu_custom_call.1} parent=5 // pred_fallthru
        _
      %p238 = scmp.le.s32.totalorder 1, %s16
      %p239 = scmp.lt.s32.totalorder %s16, 3
      %p240 = pnand %p238, %p239
      %p241 = pneg %p240
      // Predicated region
      $region45: #{tpu_custom_call.1} parent=5 // pred_check
        _
      $region46: #{tpu_custom_call.1} parent=5 // pred_check_branch
        %243 = sbr.rel (%p240) target = $region48
      $region47: #{tpu_custom_call.1} parent=5 // pred_region
        %s244 = ssub.s32 %s16, 1
        %p245 = scmp.lt.s32.totalorder %s21, 1
        %s246 = scalar_select %p245, %s21, 1
        %s247 = smul.addr %s246, 4
        %s248 = scalar_lea.vmem %s0, %s247
        %p249 = pneg %p42
        %p250 = pneg %p39
        %p251 = pneg %p63
        %p252 = pneg %p60
        %p253 = pneg %p84
        %p254 = pneg %p81
        %p255 = pneg %p105
        %p256 = pneg %p102
        %p257 = pneg %p126
        %p258 = pneg %p123
        %p259 = pneg %p147
        %p260 = pneg %p144
        %p261 = pneg %p168
        %p262 = pneg %p165
        %p263 = pneg %p194
        %p264 = pneg %p191
        %s265 = sand.u32 %s181, 1
        %s266 = scalar_lea.sflag [#allocation3], %s265
        %s267 = sand.u32 %s181, 1
        %s268 = scalar_lea.vmem [#allocation2], %s267
        %p269 = scmp.lt.s32.totalorder %s21, 1
        %s270 = scalar_select %p269, %s21, 1
        %s271 = smul.addr %s270, 4
        %s272 = scalar_lea.vmem %s0, %s271
        %v274 = vld [vmem:[%s272] sm:$0xf]
        %v275 = vld [vmem:[%s1] sm:$0x3]
        %v276 = vld [vmem:[%s2] sm:$0x1]
        %v278 = vlaneseq
        %v279 = vshrl.u32 %v278, 7
        %v280 = vsub.s32 0, %v279
        %v281 = vrot.slane %v276, %v280
        %vm283 = vcmask 31744
        %v285 = vsel %vm283, %v274, 0
        %vm287 = vcmask 1041408
        %v289 = vsel %vm287, %v275, 0
        %291 = vmatprep.subr.bf16.mxu0 0
        %292 = vmatpush1.bf16.msra.mxu0 0
        %293 = vmatprep.subr.bf16.mxu0 0
        %294 = vmatpush1.bf16.msra.mxu0 0
        %295 = vmatprep.subr.bf16.mxu0 0
        %296 = vmatpush1.bf16.msra.mxu0 0
        %297 = vmatprep.subr.bf16.mxu0 0
        %298 = vmatpush1.bf16.msra.mxu0 0
        %299 = vmatprep.subr.bf16.mxu0 0
        %300 = vmatpush1.bf16.msra.mxu0 0
        %301 = vmatprep.subr.bf16.mxu0 0
        %302 = vmatpush1.bf16.msra.mxu0 0
        %303 = vmatprep.subr.bf16.mxu0 0
        %304 = vmatpush1.bf16.msra.mxu0 0
        %305 = vmatprep.subr.bf16.mxu0 0
        %306 = vmatpush1.bf16.msra.mxu0 %v289
        %307 = vmatprep.subr.bf16.mxu0 0
        %308 = vmatpush2.bf16.msra.mxu0 0
        %309 = vmatprep.subr.bf16.mxu0 0
        %310 = vmatpush2.bf16.msra.mxu0 0
        %311 = vmatprep.subr.bf16.mxu0 0
        %312 = vmatpush2.bf16.msra.mxu0 0
        %313 = vmatprep.subr.bf16.mxu0 0
        %314 = vmatpush2.bf16.msra.mxu0 0
        %315 = vmatprep.subr.bf16.mxu0 0
        %316 = vmatpush2.bf16.msra.mxu0 0
        %317 = vmatprep.subr.bf16.mxu0 0
        %318 = vmatpush2.bf16.msra.mxu0 0
        %319 = vmatprep.subr.bf16.mxu0 0
        %320 = vmatpush2.bf16.msra.mxu0 0
        %321 = vmatprep.subr.bf16.mxu0 0
        %322 = vmatpush2.bf16.msra.mxu0 0
        %323 = vmatprep.mubr.bf16.mxu0 0
        %324 = vmatmul.mubr.bf16.gmra.mxu0 %v285
        %v325 = vpop.f32.mrf.mxu0
        %v326 = vadd.f32 %v281, %v325
        %v327 = vpop.f32.mrf.mxu0
        %v328 = vpop.f32.mrf.mxu0
        %v329 = vpop.f32.mrf.mxu0
        %330 = vdwg.mxu0
        %v331 = vmax.f32 %v326, 0.0
        %v332 = vpack.c.bf16 %v331, %v331
        %v333 = vld [vmem:[%s3] sm:$0xf]
        %v334 = vld [vmem:[%s3 + $0x4] sm:$0xf]
        %v335 = vld [vmem:[%s3 + $0x8] sm:$0xf]
        %v336 = vld [vmem:[%s3 + $0xc] sm:$0xf]
        %v337 = vld [vmem:[%s3 + $0x10] sm:$0xf]
        %v338 = vld [vmem:[%s3 + $0x14] sm:$0xf]
        %v339 = vld [vmem:[%s3 + $0x18] sm:$0xf]
        %v340 = vld [vmem:[%s3 + $0x1c] sm:$0xf]
        %v341 = vld [vmem:[%s3 + $0x20] sm:$0xf]
        %v342 = vld [vmem:[%s3 + $0x24] sm:$0xf]
        %v343 = vld [vmem:[%s3 + $0x28] sm:$0xf]
        %v344 = vld [vmem:[%s3 + $0x2c] sm:$0xf]
        %v345 = vld [vmem:[%s3 + $0x30] sm:$0xf]
        %v346 = vld [vmem:[%s3 + $0x34] sm:$0xf]
        %v347 = vld [vmem:[%s3 + $0x38] sm:$0xf]
        %v348 = vld [vmem:[%s3 + $0x3c] sm:$0xf]
        %v349 = vld [vmem:[%s4] sm:$0x1]
        %v351 = vlaneseq
        %v352 = vshrl.u32 %v351, 7
        %v353 = vsub.s32 0, %v352
        %v354 = vrot.slane %v349, %v353
        %v372 = vunpack.c.l.b16 %v333
        %v373 = vunpack.c.l.b16 %v334
        %v374 = vunpack.c.l.b16 %v335
        %v375 = vunpack.c.l.b16 %v336
        %v376 = vunpack.c.l.b16 %v337
        %v377 = vunpack.c.l.b16 %v338
        %v378 = vunpack.c.l.b16 %v339
        %v379 = vunpack.c.l.b16 %v340
        %v380 = vunpack.c.l.b16 %v341
        %v381 = vunpack.c.l.b16 %v342
        %v382 = vunpack.c.l.b16 %v343
        %v383 = vunpack.c.l.b16 %v344
        %v384 = vunpack.c.l.b16 %v345
        %v385 = vunpack.c.l.b16 %v346
        %v386 = vunpack.c.l.b16 %v347
        %v387 = vunpack.c.l.b16 %v348
        %v388 = vpack.c.b16 %v373, %v372
        %v389 = vpack.c.b16 %v375, %v374
        %v390 = vpack.c.b16 %v377, %v376
        %v391 = vpack.c.b16 %v379, %v378
        %v392 = vpack.c.b16 %v381, %v380
        %v393 = vpack.c.b16 %v383, %v382
        %v394 = vpack.c.b16 %v385, %v384
        %v395 = vpack.c.b16 %v387, %v386
        %404 = vmatprep.subr.bf16.mxu0 0
        %405 = vmatpush1.bf16.msra.mxu0 %v395
        %406 = vmatprep.subr.bf16.mxu0 0
        %407 = vmatpush1.bf16.msra.mxu0 %v394
        %408 = vmatprep.subr.bf16.mxu0 0
        %409 = vmatpush1.bf16.msra.mxu0 %v393
        %410 = vmatprep.subr.bf16.mxu0 0
        %411 = vmatpush1.bf16.msra.mxu0 %v392
        %412 = vmatprep.subr.bf16.mxu0 0
        %413 = vmatpush1.bf16.msra.mxu0 %v391
        %414 = vmatprep.subr.bf16.mxu0 0
        %415 = vmatpush1.bf16.msra.mxu0 %v390
        %416 = vmatprep.subr.bf16.mxu0 0
        %417 = vmatpush1.bf16.msra.mxu0 %v389
        %418 = vmatprep.subr.bf16.mxu0 0
        %419 = vmatpush1.bf16.msra.mxu0 %v388
        %420 = vmatprep.subr.bf16.mxu0 0
        %421 = vmatpush2.bf16.msra.mxu0 0
        %422 = vmatprep.subr.bf16.mxu0 0
        %423 = vmatpush2.bf16.msra.mxu0 0
        %424 = vmatprep.subr.bf16.mxu0 0
        %425 = vmatpush2.bf16.msra.mxu0 0
        %426 = vmatprep.subr.bf16.mxu0 0
        %427 = vmatpush2.bf16.msra.mxu0 0
        %428 = vmatprep.subr.bf16.mxu0 0
        %429 = vmatpush2.bf16.msra.mxu0 0
        %430 = vmatprep.subr.bf16.mxu0 0
        %431 = vmatpush2.bf16.msra.mxu0 0
        %432 = vmatprep.subr.bf16.mxu0 0
        %433 = vmatpush2.bf16.msra.mxu0 0
        %434 = vmatprep.subr.bf16.mxu0 0
        %435 = vmatpush2.bf16.msra.mxu0 0
        %436 = vmatprep.mubr.bf16.mxu0 0
        %437 = vmatmul.mubr.bf16.gmra.mxu0 %v332
        %v438 = vpop.f32.mrf.mxu0
        %v439 = vadd.f32 %v354, %v438
        %v440 = vpop.f32.mrf.mxu0
        %v441 = vpop.f32.mrf.mxu0
        %v442 = vpop.f32.mrf.mxu0
        %443 = vdwg.mxu0
        %v444 = vmax.f32 %v439, 0.0
        %v445 = vrot.slane %v444, 4
        %v446 = vadd.f32 %v444, %v445
        %v447 = vrot.slane %v446, 2
        %v448 = vadd.f32 %v446, %v447
        %v449 = vrot.slane %v448, 1
        %v450 = vadd.f32 %v448, %v449
        %v451 = vmul.f32 %v450, 0.125
        %v452 = vpack.c.bf16 %v451, %v451
        %v453 = vld [vmem:[%s5] sm:$0xf]
        %v454 = vld [vmem:[%s5 + $0x4] sm:$0xf]
        %v455 = vld [vmem:[%s5 + $0x8] sm:$0xf]
        %v456 = vld [vmem:[%s5 + $0xc] sm:$0xf]
        %v457 = vld [vmem:[%s5 + $0x10] sm:$0xf]
        %v458 = vld [vmem:[%s5 + $0x14] sm:$0xf]
        %v459 = vld [vmem:[%s5 + $0x18] sm:$0xf]
        %v460 = vld [vmem:[%s5 + $0x1c] sm:$0xf]
        %v461 = vld [vmem:[%s5 + $0x20] sm:$0xf]
        %v462 = vld [vmem:[%s5 + $0x24] sm:$0xf]
        %v463 = vld [vmem:[%s5 + $0x28] sm:$0xf]
        %v464 = vld [vmem:[%s5 + $0x2c] sm:$0xf]
        %v465 = vld [vmem:[%s5 + $0x30] sm:$0xf]
        %v466 = vld [vmem:[%s5 + $0x34] sm:$0xf]
        %v467 = vld [vmem:[%s5 + $0x38] sm:$0xf]
        %v468 = vld [vmem:[%s5 + $0x3c] sm:$0xf]
        %v469 = vld [vmem:[%s6] sm:$0x1]
        %v486 = vunpack.c.l.b16 %v453
        %v487 = vunpack.c.l.b16 %v454
        %v488 = vunpack.c.l.b16 %v455
        %v489 = vunpack.c.l.b16 %v456
        %v490 = vunpack.c.l.b16 %v457
        %v491 = vunpack.c.l.b16 %v458
        %v492 = vunpack.c.l.b16 %v459
        %v493 = vunpack.c.l.b16 %v460
        %v494 = vunpack.c.l.b16 %v461
        %v495 = vunpack.c.l.b16 %v462
        %v496 = vunpack.c.l.b16 %v463
        %v497 = vunpack.c.l.b16 %v464
        %v498 = vunpack.c.l.b16 %v465
        %v499 = vunpack.c.l.b16 %v466
        %v500 = vunpack.c.l.b16 %v467
        %v501 = vunpack.c.l.b16 %v468
        %v502 = vpack.c.b16 %v487, %v486
        %v503 = vpack.c.b16 %v489, %v488
        %v504 = vpack.c.b16 %v491, %v490
        %v505 = vpack.c.b16 %v493, %v492
        %v506 = vpack.c.b16 %v495, %v494
        %v507 = vpack.c.b16 %v497, %v496
        %v508 = vpack.c.b16 %v499, %v498
        %v509 = vpack.c.b16 %v501, %v500
        %518 = vmatprep.subr.bf16.mxu0 0
        %519 = vmatpush1.bf16.msra.mxu0 %v509
        %520 = vmatprep.subr.bf16.mxu0 0
        %521 = vmatpush1.bf16.msra.mxu0 %v508
        %522 = vmatprep.subr.bf16.mxu0 0
        %523 = vmatpush1.bf16.msra.mxu0 %v507
        %524 = vmatprep.subr.bf16.mxu0 0
        %525 = vmatpush1.bf16.msra.mxu0 %v506
        %526 = vmatprep.subr.bf16.mxu0 0
        %527 = vmatpush1.bf16.msra.mxu0 %v505
        %528 = vmatprep.subr.bf16.mxu0 0
        %529 = vmatpush1.bf16.msra.mxu0 %v504
        %530 = vmatprep.subr.bf16.mxu0 0
        %531 = vmatpush1.bf16.msra.mxu0 %v503
        %532 = vmatprep.subr.bf16.mxu0 0
        %533 = vmatpush1.bf16.msra.mxu0 %v502
        %534 = vmatprep.subr.bf16.mxu0 0
        %535 = vmatpush2.bf16.msra.mxu0 0
        %536 = vmatprep.subr.bf16.mxu0 0
        %537 = vmatpush2.bf16.msra.mxu0 0
        %538 = vmatprep.subr.bf16.mxu0 0
        %539 = vmatpush2.bf16.msra.mxu0 0
        %540 = vmatprep.subr.bf16.mxu0 0
        %541 = vmatpush2.bf16.msra.mxu0 0
        %542 = vmatprep.subr.bf16.mxu0 0
        %543 = vmatpush2.bf16.msra.mxu0 0
        %544 = vmatprep.subr.bf16.mxu0 0
        %545 = vmatpush2.bf16.msra.mxu0 0
        %546 = vmatprep.subr.bf16.mxu0 0
        %547 = vmatpush2.bf16.msra.mxu0 0
        %548 = vmatprep.subr.bf16.mxu0 0
        %549 = vmatpush2.bf16.msra.mxu0 0
        %550 = vmatprep.mubr.bf16.mxu0 0
        %551 = vmatmul.mubr.bf16.gmra.mxu0 %v452
        %v552 = vpop.f32.mrf.mxu0
        %v553 = vadd.f32 %v469, %v552
        %v554 = vpop.f32.mrf.mxu0
        %v555 = vpop.f32.mrf.mxu0
        %v556 = vpop.f32.mrf.mxu0
        %557 = vdwg.mxu0
        %vm558 = vcmask 253952
        %559 = vst.msk [vmem:[%s268] sm:$0x1] %vm558, %v553
        %s560 = sand.u32 %s181, 1
        %s561 = scalar_lea.sflag [#allocation3], %s560
        %s562 = sand.u32 %s181, 1
        %s563 = scalar_lea.vmem [#allocation2], %s562
        // Predicated region
        $region49: #{tpu_custom_call.1} parent=47 // pred_check
          %p564 = pneg %p191
        $region50: #{tpu_custom_call.1} parent=47 // pred_check_branch
          %566 = sbr.rel (%p564) target = $region52
        $region51: #{tpu_custom_call.1} parent=47 // pred_region
          %s568 = ssub.s32 16, 16
          %569 = vsyncadd %s561, %s568
          %s570 = smul.addr %s21, 16
          %s571 = scalar_lea.hbm %s7, %s570
          %s573 = sshll.u32 %s563, 4
          %s574 = int_to_ptr.vmem [resolvable:$true] %s573
          %576 = dma.vmem_to_hbm [thread:$0]  %s574, 16, %s571, %s561
        $region52: #{tpu_custom_call.1} parent=47 // pred_fallthru
          _
      $region48: #{tpu_custom_call.1} parent=5 // pred_fallthru
        _
      %p577 = scmp.le.s32.totalorder 2, %s16
      // Predicated region
      $region53: #{tpu_custom_call.1} parent=5 // pred_check
        %p578 = pneg %p577
      $region54: #{tpu_custom_call.1} parent=5 // pred_check_branch
        %580 = sbr.rel (%p578) target = $region56
      $region55: #{tpu_custom_call.1} parent=5 // pred_region
        %s581 = ssub.s32 %s16, 2
        // Predicated region
        $region57: #{tpu_custom_call.1} parent=55 // pred_check
          %p582 = pneg %p197
        $region58: #{tpu_custom_call.1} parent=55 // pred_check_branch
          %584 = sbr.rel (%p582) target = $region60
        $region59: #{tpu_custom_call.1} parent=55 // pred_region
          %s585 = sand.u32 %s182, 1
          %s586 = scalar_lea.sflag [#allocation3], %s585
          %s587 = sand.u32 %s182, 1
          %s588 = scalar_lea.vmem [#allocation2], %s587
          %589 = dma.done %s586, 16
        $region60: #{tpu_custom_call.1} parent=55 // pred_fallthru
          _
      $region56: #{tpu_custom_call.1} parent=5 // pred_fallthru
        _
    $region6: #{tpu_custom_call.1} parent=1 // loop_footer
      %s20 = sadd.s32 1, %s16
    $region7: #{tpu_custom_call.1} parent=1 // loop_footer_branch
      %15 = sbr.rel target = $region3
    $region8: #{tpu_custom_call.1} parent=1 // loop_exit
      _
    %590 = vsyncpa [#allocation3], 1
    %s591 = scalar_lea.sflag [#allocation3], 1
    %592 = vsyncpa %s591, 1

// kernel: tpu_custom_call.1
$region0: #{tpu_custom_call.1}
  #allocation0 [shape = 'u32[]', space=smem, size = 0x4, offset = 0x4, fixed_abs, tag = 'smem constant byte address 0x4 - core index']
  #allocation1 [shape = 'u32[144,128]{1,0:T(1,128)}', space=vmem, size = 0x12000, scoped, tag = 'internal scratch']
  %s0 = inlined_call_operand.vmem [shape: bf16[2,8,4], index: 0, kind: input, shape index: {}]
  %s1 = inlined_call_operand.vmem [shape: bf16[4,128], index: 1, kind: input, shape index: {}]
  %s2 = inlined_call_operand.vmem [shape: f32[1,128], index: 2, kind: input, shape index: {}]
  %s3 = inlined_call_operand.vmem [shape: bf16[128,128], index: 3, kind: input, shape index: {}]
  %s4 = inlined_call_operand.vmem [shape: f32[1,128], index: 4, kind: input, shape index: {}]
  %s5 = inlined_call_operand.vmem [shape: bf16[128,32], index: 5, kind: input, shape index: {}]
  %s6 = inlined_call_operand.vmem [shape: f32[1,32], index: 6, kind: input, shape index: {}]
  %s7 = inlined_call_operand.hbm [shape: f32[2,1,32], index: 7, kind: output, shape index: {}]
  %s8 = sld [smem:[#allocation0]]
  $region61: #{tpu_custom_call.1} parent=0
    _
  %s10 = ssub.s32 1, %s8
  %s11 = scalar_select 0, %s10, %s8
  $region1: #{tpu_custom_call.1} parent=0
    #allocation2 [shape = 'u8[1024]{0}', space=vmem, size = 0x400, scoped, tag = 'output window, operand 0']
    #allocation3 [shape = 's32[2]{0}', space=sflag, size = 0x8, scoped, tag = 'scoped memory for tpu_custom_call.1']
    %12 = vsyncpa [#allocation3], 0
    %s13 = scalar_lea.sflag [#allocation3], 1
    %14 = vsyncpa %s13, 0
    loop: start=0, step=1, limit=4
    $region2: #{tpu_custom_call.1} parent=1 // loop_pre_header
      _
    $region3: #{tpu_custom_call.1} parent=1 // loop_header
      %s16 = sphi 0, %s20
      %p17 = scmp.ge.s32.totalorder %s16, 4
      %s26 = sphi 0, %s28
      %s29 = sphi 0, %s26
      %s30 = sphi 0, %s29
      %s46 = sphi 0, %s30
      %s50 = sphi 0, %s50
      %s52 = sphi 0, %s50
      %s53 = sphi 0, %s52
      %s67 = sphi 0, %s53
      %s71 = sphi 0, %s71
      %s73 = sphi 0, %s71
      %s74 = sphi 0, %s73
      %s88 = sphi 0, %s74
      %s92 = sphi 0, %s92
      %s94 = sphi 0, %s92
      %s95 = sphi 0, %s94
      %s109 = sphi 0, %s95
      %s113 = sphi 0, %s113
      %s115 = sphi 0, %s113
      %s116 = sphi 0, %s115
      %s130 = sphi 0, %s116
      %s134 = sphi 0, %s134
      %s136 = sphi 0, %s134
      %s137 = sphi 0, %s136
      %s151 = sphi 0, %s137
      %s155 = sphi 0, %s155
      %s157 = sphi 0, %s155
      %s158 = sphi 0, %s157
      %s172 = sphi 0, %s158
      %s178 = sphi 0, %s180
      %s181 = sphi 0, %s178
      %s182 = sphi 0, %s181
      %s198 = sphi 0, %s182
    $region4: #{tpu_custom_call.1} parent=1 // loop_header_branch
      %19 = sbr.rel (%p17) target = $region8
    $region5: #{tpu_custom_call.1} parent=1 // loop_body
      %s21 = ssub.s32 %s16, 1
      %s22 = ssub.s32 %s16, 2
      %s23 = sadd.s32 %s16, 1
      %s24 = ssub.s32 %s16, %s23
      %p25 = scmp.eq.s32.totalorder %s24, 0
      %s27 = sadd.s32 %s26, 1
      %s28 = scalar_select %p25, %s26, %s27
      %p31 = pneg %p25
      %p32 = scmp.eq.s32.totalorder %s16, 1
      %p33 = por %p31, %p32
      %p34 = scmp.ne.s32.totalorder %s26, %s29
      %p35 = scmp.eq.s32.totalorder %s16, 0
      %p36 = por %p34, %p35
      %p37 = scmp.ne.s32.totalorder %s26, %s29
      %p38 = scmp.eq.s32.totalorder %s21, 1
      %p39 = por %p37, %p38
      %p40 = scmp.ne.s32.totalorder %s29, %s30
      %p41 = scmp.eq.s32.totalorder %s21, 0
      %p42 = por %p40, %p41
      %p43 = scmp.ne.s32.totalorder %s29, %s30
      %p44 = scmp.eq.s32.totalorder %s22, 1
      %p45 = por %p43, %p44
      %p47 = scmp.ne.s32.totalorder %s30, %s46
      %p48 = scmp.eq.s32.totalorder %s22, 0
      %p49 = por %p47, %p48
      %s51 = sadd.s32 %s50, 1
      %p54 = scmp.eq.s32.totalorder %s16, 1
      %p55 = scmp.ne.s32.totalorder %s50, %s52
      %p56 = scmp.eq.s32.totalorder %s16, 0
      %p57 = por %p55, %p56
      %p58 = scmp.ne.s32.totalorder %s50, %s52
      %p59 = scmp.eq.s32.totalorder %s21, 1
      %p60 = por %p58, %p59
      %p61 = scmp.ne.s32.totalorder %s52, %s53
      %p62 = scmp.eq.s32.totalorder %s21, 0
      %p63 = por %p61, %p62
      %p64 = scmp.ne.s32.totalorder %s52, %s53
      %p65 = scmp.eq.s32.totalorder %s22, 1
      %p66 = por %p64, %p65
      %p68 = scmp.ne.s32.totalorder %s53, %s67
      %p69 = scmp.eq.s32.totalorder %s22, 0
      %p70 = por %p68, %p69
      %s72 = sadd.s32 %s71, 1
      %p75 = scmp.eq.s32.totalorder %s16, 1
      %p76 = scmp.ne.s32.totalorder %s71, %s73
      %p77 = scmp.eq.s32.totalorder %s16, 0
      %p78 = por %p76, %p77
      %p79 = scmp.ne.s32.totalorder %s71, %s73
      %p80 = scmp.eq.s32.totalorder %s21, 1
      %p81 = por %p79, %p80
      %p82 = scmp.ne.s32.totalorder %s73, %s74
      %p83 = scmp.eq.s32.totalorder %s21, 0
      %p84 = por %p82, %p83
      %p85 = scmp.ne.s32.totalorder %s73, %s74
      %p86 = scmp.eq.s32.totalorder %s22, 1
      %p87 = por %p85, %p86
      %p89 = scmp.ne.s32.totalorder %s74, %s88
      %p90 = scmp.eq.s32.totalorder %s22, 0
      %p91 = por %p89, %p90
      %s93 = sadd.s32 %s92, 1
      %p96 = scmp.eq.s32.totalorder %s16, 1
      %p97 = scmp.ne.s32.totalorder %s92, %s94
      %p98 = scmp.eq.s32.totalorder %s16, 0
      %p99 = por %p97, %p98
      %p100 = scmp.ne.s32.totalorder %s92, %s94
      %p101 = scmp.eq.s32.totalorder %s21, 1
      %p102 = por %p100, %p101
      %p103 = scmp.ne.s32.totalorder %s94, %s95
      %p104 = scmp.eq.s32.totalorder %s21, 0
      %p105 = por %p103, %p104
      %p106 = scmp.ne.s32.totalorder %s94, %s95
      %p107 = scmp.eq.s32.totalorder %s22, 1
      %p108 = por %p106, %p107
      %p110 = scmp.ne.s32.totalorder %s95, %s109
      %p111 = scmp.eq.s32.totalorder %s22, 0
      %p112 = por %p110, %p111
      %s114 = sadd.s32 %s113, 1
      %p117 = scmp.eq.s32.totalorder %s16, 1
      %p118 = scmp.ne.s32.totalorder %s113, %s115
      %p119 = scmp.eq.s32.totalorder %s16, 0
      %p120 = por %p118, %p119
      %p121 = scmp.ne.s32.totalorder %s113, %s115
      %p122 = scmp.eq.s32.totalorder %s21, 1
      %p123 = por %p121, %p122
      %p124 = scmp.ne.s32.totalorder %s115, %s116
      %p125 = scmp.eq.s32.totalorder %s21, 0
      %p126 = por %p124, %p125
      %p127 = scmp.ne.s32.totalorder %s115, %s116
      %p128 = scmp.eq.s32.totalorder %s22, 1
      %p129 = por %p127, %p128
      %p131 = scmp.ne.s32.totalorder %s116, %s130
      %p132 = scmp.eq.s32.totalorder %s22, 0
      %p133 = por %p131, %p132
      %s135 = sadd.s32 %s134, 1
      %p138 = scmp.eq.s32.totalorder %s16, 1
      %p139 = scmp.ne.s32.totalorder %s134, %s136
      %p140 = scmp.eq.s32.totalorder %s16, 0
      %p141 = por %p139, %p140
      %p142 = scmp.ne.s32.totalorder %s134, %s136
      %p143 = scmp.eq.s32.totalorder %s21, 1
      %p144 = por %p142, %p143
      %p145 = scmp.ne.s32.totalorder %s136, %s137
      %p146 = scmp.eq.s32.totalorder %s21, 0
      %p147 = por %p145, %p146
      %p148 = scmp.ne.s32.totalorder %s136, %s137
      %p149 = scmp.eq.s32.totalorder %s22, 1
      %p150 = por %p148, %p149
      %p152 = scmp.ne.s32.totalorder %s137, %s151
      %p153 = scmp.eq.s32.totalorder %s22, 0
      %p154 = por %p152, %p153
      %s156 = sadd.s32 %s155, 1
      %p159 = scmp.eq.s32.totalorder %s16, 1
      %p160 = scmp.ne.s32.totalorder %s155, %s157
      %p161 = scmp.eq.s32.totalorder %s16, 0
      %p162 = por %p160, %p161
      %p163 = scmp.ne.s32.totalorder %s155, %s157
      %p164 = scmp.eq.s32.totalorder %s21, 1
      %p165 = por %p163, %p164
      %p166 = scmp.ne.s32.totalorder %s157, %s158
      %p167 = scmp.eq.s32.totalorder %s21, 0
      %p168 = por %p166, %p167
      %p169 = scmp.ne.s32.totalorder %s157, %s158
      %p170 = scmp.eq.s32.totalorder %s22, 1
      %p171 = por %p169, %p170
      %p173 = scmp.ne.s32.totalorder %s158, %s172
      %p174 = scmp.eq.s32.totalorder %s22, 0
      %p175 = por %p173, %p174
      %s176 = ssub.s32 %s16, %s23
      %p177 = scmp.eq.s32.totalorder %s176, 0
      %s179 = sadd.s32 %s178, 1
      %s180 = scalar_select %p177, %s178, %s179
      %p183 = pneg %p177
      %p184 = scmp.eq.s32.totalorder %s16, 1
      %p185 = por %p183, %p184
      %p186 = scmp.ne.s32.totalorder %s178, %s181
      %p187 = scmp.eq.s32.totalorder %s16, 0
      %p188 = por %p186, %p187
      %p189 = scmp.ne.s32.totalorder %s178, %s181
      %p190 = scmp.eq.s32.totalorder %s21, 1
      %p191 = por %p189, %p190
      %p192 = scmp.ne.s32.totalorder %s181, %s182
      %p193 = scmp.eq.s32.totalorder %s21, 0
      %p194 = por %p192, %p193
      %p195 = scmp.ne.s32.totalorder %s181, %s182
      %p196 = scmp.eq.s32.totalorder %s22, 1
      %p197 = por %p195, %p196
      %p199 = scmp.ne.s32.totalorder %s182, %s198
      %p200 = scmp.eq.s32.totalorder %s22, 0
      %p201 = por %p199, %p200
      %p202 = scmp.le.s32.totalorder 1, %s16
      %p203 = scmp.lt.s32.totalorder %s16, 3
      %p204 = pnand %p202, %p203
      %p205 = pneg %p204
      // Predicated region
      $region9: #{tpu_custom_call.1} parent=5 // pred_check
        _
      $region10: #{tpu_custom_call.1} parent=5 // pred_check_branch
        %207 = sbr.rel (%p204) target = $region12
      $region11: #{tpu_custom_call.1} parent=5 // pred_region
        %s208 = ssub.s32 %s16, 1
        // Predicated region
        $region13: #{tpu_custom_call.1} parent=11 // pred_check
          %p209 = pneg %p63
        $region14: #{tpu_custom_call.1} parent=11 // pred_check_branch
          %211 = sbr.rel (%p209) target = $region16
        $region15: #{tpu_custom_call.1} parent=11 // pred_region
          _
        $region16: #{tpu_custom_call.1} parent=11 // pred_fallthru
          _
        // Predicated region
        $region17: #{tpu_custom_call.1} parent=11 // pred_check
          %p212 = pneg %p84
        $region18: #{tpu_custom_call.1} parent=11 // pred_check_branch
          %214 = sbr.rel (%p212) target = $region20
        $region19: #{tpu_custom_call.1} parent=11 // pred_region
          _
        $region20: #{tpu_custom_call.1} parent=11 // pred_fallthru
          _
        // Predicated region
        $region21: #{tpu_custom_call.1} parent=11 // pred_check
          %p215 = pneg %p105
        $region22: #{tpu_custom_call.1} parent=11 // pred_check_branch
          %217 = sbr.rel (%p215) target = $region24
        $region23: #{tpu_custom_call.1} parent=11 // pred_region
          _
        $region24: #{tpu_custom_call.1} parent=11 // pred_fallthru
          _
        // Predicated region
        $region25: #{tpu_custom_call.1} parent=11 // pred_check
          %p218 = pneg %p126
        $region26: #{tpu_custom_call.1} parent=11 // pred_check_branch
          %220 = sbr.rel (%p218) target = $region28
        $region27: #{tpu_custom_call.1} parent=11 // pred_region
          _
        $region28: #{tpu_custom_call.1} parent=11 // pred_fallthru
          _
        // Predicated region
        $region29: #{tpu_custom_call.1} parent=11 // pred_check
          %p221 = pneg %p147
        $region30: #{tpu_custom_call.1} parent=11 // pred_check_branch
          %223 = sbr.rel (%p221) target = $region32
        $region31: #{tpu_custom_call.1} parent=11 // pred_region
          _
        $region32: #{tpu_custom_call.1} parent=11 // pred_fallthru
          _
        // Predicated region
        $region33: #{tpu_custom_call.1} parent=11 // pred_check
          %p224 = pneg %p168
        $region34: #{tpu_custom_call.1} parent=11 // pred_check_branch
          %226 = sbr.rel (%p224) target = $region36
        $region35: #{tpu_custom_call.1} parent=11 // pred_region
          _
        $region36: #{tpu_custom_call.1} parent=11 // pred_fallthru
          _
      $region12: #{tpu_custom_call.1} parent=5 // pred_fallthru
        _
      %p227 = scmp.lt.s32.totalorder %s16, 2
      // Predicated region
      $region37: #{tpu_custom_call.1} parent=5 // pred_check
        %p228 = pneg %p227
      $region38: #{tpu_custom_call.1} parent=5 // pred_check_branch
        %230 = sbr.rel (%p228) target = $region40
      $region39: #{tpu_custom_call.1} parent=5 // pred_region
        // Predicated region
        $region41: #{tpu_custom_call.1} parent=39 // pred_check
          %p231 = pneg %p36
        $region42: #{tpu_custom_call.1} parent=39 // pred_check_branch
          %233 = sbr.rel (%p231) target = $region44
        $region43: #{tpu_custom_call.1} parent=39 // pred_region
          %p234 = scmp.lt.s32.totalorder %s16, 1
          %s235 = scalar_select %p234, %s16, 1
          %s236 = smul.addr %s235, 4
          %s237 = scalar_lea.vmem %s0, %s236
        $region44: #{tpu_custom_call.1} parent=39 // pred_fallthru
          _
      $region40: #{tpu_custom_call.1} parent=5 // pred_fallthru
        _
      %p238 = scmp.le.s32.totalorder 1, %s16
      %p239 = scmp.lt.s32.totalorder %s16, 3
      %p240 = pnand %p238, %p239
      %p241 = pneg %p240
      // Predicated region
      $region45: #{tpu_custom_call.1} parent=5 // pred_check
        _
      $region46: #{tpu_custom_call.1} parent=5 // pred_check_branch
        %243 = sbr.rel (%p240) target = $region48
      $region47: #{tpu_custom_call.1} parent=5 // pred_region
        %s244 = ssub.s32 %s16, 1
        %p245 = scmp.lt.s32.totalorder %s21, 1
        %s246 = scalar_select %p245, %s21, 1
        %s247 = smul.addr %s246, 4
        %s248 = scalar_lea.vmem %s0, %s247
        %p249 = pneg %p42
        %p250 = pneg %p39
        %p251 = pneg %p63
        %p252 = pneg %p60
        %p253 = pneg %p84
        %p254 = pneg %p81
        %p255 = pneg %p105
        %p256 = pneg %p102
        %p257 = pneg %p126
        %p258 = pneg %p123
        %p259 = pneg %p147
        %p260 = pneg %p144
        %p261 = pneg %p168
        %p262 = pneg %p165
        %p263 = pneg %p194
        %p264 = pneg %p191
        %s265 = sand.u32 %s181, 1
        %s266 = scalar_lea.sflag [#allocation3], %s265
        %s267 = sand.u32 %s181, 1
        %s268 = scalar_lea.vmem [#allocation2], %s267
        %p269 = scmp.lt.s32.totalorder %s21, 1
        %s270 = scalar_select %p269, %s21, 1
        %s271 = smul.addr %s270, 4
        %s272 = scalar_lea.vmem %s0, %s271
        %v274 = vld [vmem:[%s272] sm:$0xf]
        %v275 = vld [vmem:[%s1] sm:$0x3]
        %v276 = vld [vmem:[%s2] sm:$0x1]
        %v278 = vlaneseq
        %v279 = vshrl.u32 %v278, 7
        %v280 = vsub.s32 0, %v279
        %v281 = vrot.slane %v276, %v280
        %vm283 = vcmask 31744
        %v285 = vsel %vm283, %v274, 0
        %vm287 = vcmask 1041408
        %v289 = vsel %vm287, %v275, 0
        %291 = vmatprep.subr.bf16.mxu0 0
        %292 = vmatpush1.bf16.msra.mxu0 0
        %293 = vmatprep.subr.bf16.mxu0 0
        %294 = vmatpush1.bf16.msra.mxu0 0
        %295 = vmatprep.subr.bf16.mxu0 0
        %296 = vmatpush1.bf16.msra.mxu0 0
        %297 = vmatprep.subr.bf16.mxu0 0
        %298 = vmatpush1.bf16.msra.mxu0 0
        %299 = vmatprep.subr.bf16.mxu0 0
        %300 = vmatpush1.bf16.msra.mxu0 0
        %301 = vmatprep.subr.bf16.mxu0 0
        %302 = vmatpush1.bf16.msra.mxu0 0
        %303 = vmatprep.subr.bf16.mxu0 0
        %304 = vmatpush1.bf16.msra.mxu0 0
        %305 = vmatprep.subr.bf16.mxu0 0
        %306 = vmatpush1.bf16.msra.mxu0 %v289
        %307 = vmatprep.subr.bf16.mxu0 0
        %308 = vmatpush2.bf16.msra.mxu0 0
        %309 = vmatprep.subr.bf16.mxu0 0
        %310 = vmatpush2.bf16.msra.mxu0 0
        %311 = vmatprep.subr.bf16.mxu0 0
        %312 = vmatpush2.bf16.msra.mxu0 0
        %313 = vmatprep.subr.bf16.mxu0 0
        %314 = vmatpush2.bf16.msra.mxu0 0
        %315 = vmatprep.subr.bf16.mxu0 0
        %316 = vmatpush2.bf16.msra.mxu0 0
        %317 = vmatprep.subr.bf16.mxu0 0
        %318 = vmatpush2.bf16.msra.mxu0 0
        %319 = vmatprep.subr.bf16.mxu0 0
        %320 = vmatpush2.bf16.msra.mxu0 0
        %321 = vmatprep.subr.bf16.mxu0 0
        %322 = vmatpush2.bf16.msra.mxu0 0
        %323 = vmatprep.mubr.bf16.mxu0 0
        %324 = vmatmul.mubr.bf16.gmra.mxu0 %v285
        %v325 = vpop.f32.mrf.mxu0
        %v326 = vadd.f32 %v281, %v325
        %v327 = vpop.f32.mrf.mxu0
        %v328 = vpop.f32.mrf.mxu0
        %v329 = vpop.f32.mrf.mxu0
        %330 = vdwg.mxu0
        %v331 = vmax.f32 %v326, 0.0
        %v332 = vpack.c.bf16 %v331, %v331
        %v333 = vld [vmem:[%s3] sm:$0xf]
        %v334 = vld [vmem:[%s3 + $0x4] sm:$0xf]
        %v335 = vld [vmem:[%s3 + $0x8] sm:$0xf]
        %v336 = vld [vmem:[%s3 + $0xc] sm:$0xf]
        %v337 = vld [vmem:[%s3 + $0x10] sm:$0xf]
        %v338 = vld [vmem:[%s3 + $0x14] sm:$0xf]
        %v339 = vld [vmem:[%s3 + $0x18] sm:$0xf]
        %v340 = vld [vmem:[%s3 + $0x1c] sm:$0xf]
        %v341 = vld [vmem:[%s3 + $0x20] sm:$0xf]
        %v342 = vld [vmem:[%s3 + $0x24] sm:$0xf]
        %v343 = vld [vmem:[%s3 + $0x28] sm:$0xf]
        %v344 = vld [vmem:[%s3 + $0x2c] sm:$0xf]
        %v345 = vld [vmem:[%s3 + $0x30] sm:$0xf]
        %v346 = vld [vmem:[%s3 + $0x34] sm:$0xf]
        %v347 = vld [vmem:[%s3 + $0x38] sm:$0xf]
        %v348 = vld [vmem:[%s3 + $0x3c] sm:$0xf]
        %v349 = vld [vmem:[%s4] sm:$0x1]
        %v351 = vlaneseq
        %v352 = vshrl.u32 %v351, 7
        %v353 = vsub.s32 0, %v352
        %v354 = vrot.slane %v349, %v353
        %v372 = vunpack.c.l.b16 %v333
        %v373 = vunpack.c.l.b16 %v334
        %v374 = vunpack.c.l.b16 %v335
        %v375 = vunpack.c.l.b16 %v336
        %v376 = vunpack.c.l.b16 %v337
        %v377 = vunpack.c.l.b16 %v338
        %v378 = vunpack.c.l.b16 %v339
        %v379 = vunpack.c.l.b16 %v340
        %v380 = vunpack.c.l.b16 %v341
        %v381 = vunpack.c.l.b16 %v342
        %v382 = vunpack.c.l.b16 %v343
        %v383 = vunpack.c.l.b16 %v344
        %v384 = vunpack.c.l.b16 %v345
        %v385 = vunpack.c.l.b16 %v346
        %v386 = vunpack.c.l.b16 %v347
        %v387 = vunpack.c.l.b16 %v348
        %v388 = vpack.c.b16 %v373, %v372
        %v389 = vpack.c.b16 %v375, %v374
        %v390 = vpack.c.b16 %v377, %v376
        %v391 = vpack.c.b16 %v379, %v378
        %v392 = vpack.c.b16 %v381, %v380
        %v393 = vpack.c.b16 %v383, %v382
        %v394 = vpack.c.b16 %v385, %v384
        %v395 = vpack.c.b16 %v387, %v386
        %404 = vmatprep.subr.bf16.mxu0 0
        %405 = vmatpush1.bf16.msra.mxu0 %v395
        %406 = vmatprep.subr.bf16.mxu0 0
        %407 = vmatpush1.bf16.msra.mxu0 %v394
        %408 = vmatprep.subr.bf16.mxu0 0
        %409 = vmatpush1.bf16.msra.mxu0 %v393
        %410 = vmatprep.subr.bf16.mxu0 0
        %411 = vmatpush1.bf16.msra.mxu0 %v392
        %412 = vmatprep.subr.bf16.mxu0 0
        %413 = vmatpush1.bf16.msra.mxu0 %v391
        %414 = vmatprep.subr.bf16.mxu0 0
        %415 = vmatpush1.bf16.msra.mxu0 %v390
        %416 = vmatprep.subr.bf16.mxu0 0
        %417 = vmatpush1.bf16.msra.mxu0 %v389
        %418 = vmatprep.subr.bf16.mxu0 0
        %419 = vmatpush1.bf16.msra.mxu0 %v388
        %420 = vmatprep.subr.bf16.mxu0 0
        %421 = vmatpush2.bf16.msra.mxu0 0
        %422 = vmatprep.subr.bf16.mxu0 0
        %423 = vmatpush2.bf16.msra.mxu0 0
        %424 = vmatprep.subr.bf16.mxu0 0
        %425 = vmatpush2.bf16.msra.mxu0 0
        %426 = vmatprep.subr.bf16.mxu0 0
        %427 = vmatpush2.bf16.msra.mxu0 0
        %428 = vmatprep.subr.bf16.mxu0 0
        %429 = vmatpush2.bf16.msra.mxu0 0
        %430 = vmatprep.subr.bf16.mxu0 0
        %431 = vmatpush2.bf16.msra.mxu0 0
        %432 = vmatprep.subr.bf16.mxu0 0
        %433 = vmatpush2.bf16.msra.mxu0 0
        %434 = vmatprep.subr.bf16.mxu0 0
        %435 = vmatpush2.bf16.msra.mxu0 0
        %436 = vmatprep.mubr.bf16.mxu0 0
        %437 = vmatmul.mubr.bf16.gmra.mxu0 %v332
        %v438 = vpop.f32.mrf.mxu0
        %v439 = vadd.f32 %v354, %v438
        %v440 = vpop.f32.mrf.mxu0
        %v441 = vpop.f32.mrf.mxu0
        %v442 = vpop.f32.mrf.mxu0
        %443 = vdwg.mxu0
        %v444 = vmax.f32 %v439, 0.0
        %v445 = vrot.slane %v444, 4
        %v446 = vadd.f32 %v444, %v445
        %v447 = vrot.slane %v446, 2
        %v448 = vadd.f32 %v446, %v447
        %v449 = vrot.slane %v448, 1
        %v450 = vadd.f32 %v448, %v449
        %v451 = vmul.f32 %v450, 0.125
        %v452 = vpack.c.bf16 %v451, %v451
        %v453 = vld [vmem:[%s5] sm:$0xf]
        %v454 = vld [vmem:[%s5 + $0x4] sm:$0xf]
        %v455 = vld [vmem:[%s5 + $0x8] sm:$0xf]
        %v456 = vld [vmem:[%s5 + $0xc] sm:$0xf]
        %v457 = vld [vmem:[%s5 + $0x10] sm:$0xf]
        %v458 = vld [vmem:[%s5 + $0x14] sm:$0xf]
        %v459 = vld [vmem:[%s5 + $0x18] sm:$0xf]
        %v460 = vld [vmem:[%s5 + $0x1c] sm:$0xf]
        %v461 = vld [vmem:[%s5 + $0x20] sm:$0xf]
        %v462 = vld [vmem:[%s5 + $0x24] sm:$0xf]
        %v463 = vld [vmem:[%s5 + $0x28] sm:$0xf]
        %v464 = vld [vmem:[%s5 + $0x2c] sm:$0xf]
        %v465 = vld [vmem:[%s5 + $0x30] sm:$0xf]
        %v466 = vld [vmem:[%s5 + $0x34] sm:$0xf]
        %v467 = vld [vmem:[%s5 + $0x38] sm:$0xf]
        %v468 = vld [vmem:[%s5 + $0x3c] sm:$0xf]
        %v469 = vld [vmem:[%s6] sm:$0x1]
        %v486 = vunpack.c.l.b16 %v453
        %v487 = vunpack.c.l.b16 %v454
        %v488 = vunpack.c.l.b16 %v455
        %v489 = vunpack.c.l.b16 %v456
        %v490 = vunpack.c.l.b16 %v457
        %v491 = vunpack.c.l.b16 %v458
        %v492 = vunpack.c.l.b16 %v459
        %v493 = vunpack.c.l.b16 %v460
        %v494 = vunpack.c.l.b16 %v461
        %v495 = vunpack.c.l.b16 %v462
        %v496 = vunpack.c.l.b16 %v463
        %v497 = vunpack.c.l.b16 %v464
        %v498 = vunpack.c.l.b16 %v465
        %v499 = vunpack.c.l.b16 %v466
        %v500 = vunpack.c.l.b16 %v467
        %v501 = vunpack.c.l.b16 %v468
        %v502 = vpack.c.b16 %v487, %v486
        %v503 = vpack.c.b16 %v489, %v488
        %v504 = vpack.c.b16 %v491, %v490
        %v505 = vpack.c.b16 %v493, %v492
        %v506 = vpack.c.b16 %v495, %v494
        %v507 = vpack.c.b16 %v497, %v496
        %v508 = vpack.c.b16 %v499, %v498
        %v509 = vpack.c.b16 %v501, %v500
        %518 = vmatprep.subr.bf16.mxu0 0
        %519 = vmatpush1.bf16.msra.mxu0 %v509
        %520 = vmatprep.subr.bf16.mxu0 0
        %521 = vmatpush1.bf16.msra.mxu0 %v508
        %522 = vmatprep.subr.bf16.mxu0 0
        %523 = vmatpush1.bf16.msra.mxu0 %v507
        %524 = vmatprep.subr.bf16.mxu0 0
        %525 = vmatpush1.bf16.msra.mxu0 %v506
        %526 = vmatprep.subr.bf16.mxu0 0
        %527 = vmatpush1.bf16.msra.mxu0 %v505
        %528 = vmatprep.subr.bf16.mxu0 0
        %529 = vmatpush1.bf16.msra.mxu0 %v504
        %530 = vmatprep.subr.bf16.mxu0 0
        %531 = vmatpush1.bf16.msra.mxu0 %v503
        %532 = vmatprep.subr.bf16.mxu0 0
        %533 = vmatpush1.bf16.msra.mxu0 %v502
        %534 = vmatprep.subr.bf16.mxu0 0
        %535 = vmatpush2.bf16.msra.mxu0 0
        %536 = vmatprep.subr.bf16.mxu0 0
        %537 = vmatpush2.bf16.msra.mxu0 0
        %538 = vmatprep.subr.bf16.mxu0 0
        %539 = vmatpush2.bf16.msra.mxu0 0
        %540 = vmatprep.subr.bf16.mxu0 0
        %541 = vmatpush2.bf16.msra.mxu0 0
        %542 = vmatprep.subr.bf16.mxu0 0
        %543 = vmatpush2.bf16.msra.mxu0 0
        %544 = vmatprep.subr.bf16.mxu0 0
        %545 = vmatpush2.bf16.msra.mxu0 0
        %546 = vmatprep.subr.bf16.mxu0 0
        %547 = vmatpush2.bf16.msra.mxu0 0
        %548 = vmatprep.subr.bf16.mxu0 0
        %549 = vmatpush2.bf16.msra.mxu0 0
        %550 = vmatprep.mubr.bf16.mxu0 0
        %551 = vmatmul.mubr.bf16.gmra.mxu0 %v452
        %v552 = vpop.f32.mrf.mxu0
        %v553 = vadd.f32 %v469, %v552
        %v554 = vpop.f32.mrf.mxu0
        %v555 = vpop.f32.mrf.mxu0
        %v556 = vpop.f32.mrf.mxu0
        %557 = vdwg.mxu0
        %vm558 = vcmask 253952
        %559 = vst.msk [vmem:[%s268] sm:$0x1] %vm558, %v553
        %s560 = sand.u32 %s181, 1
        %s561 = scalar_lea.sflag [#allocation3], %s560
        %s562 = sand.u32 %s181, 1
        %s563 = scalar_lea.vmem [#allocation2], %s562
        // Predicated region
        $region49: #{tpu_custom_call.1} parent=47 // pred_check
          %p564 = pneg %p191
        $region50: #{tpu_custom_call.1} parent=47 // pred_check_branch
          %566 = sbr.rel (%p564) target = $region52
        $region51: #{tpu_custom_call.1} parent=47 // pred_region
          %s568 = ssub.s32 16, 16
          %569 = vsyncadd %s561, %s568
          %s570 = smul.addr %s21, 16
          %s571 = scalar_lea.hbm %s7, %s570
          %s573 = sshll.u32 %s563, 4
          %s574 = int_to_ptr.vmem [resolvable:$true] %s573
          %576 = dma.vmem_to_hbm [thread:$0]  %s574, 16, %s571, %s561
        $region52: #{tpu_custom_call.1} parent=47 // pred_fallthru
          _
      $region48: #{tpu_custom_call.1} parent=5 // pred_fallthru
        _
      %p577 = scmp.le.s32.totalorder 2, %s16
      // Predicated region
      $region53: #{tpu_custom_call.1} parent=5 // pred_check
        %p578 = pneg %p577
      $region54: #{tpu_custom_call.1} parent=5 // pred_check_branch
        %580 = sbr.rel (%p578) target = $region56
      $region55: #{tpu_custom_call.1} parent=5 // pred_region
        %s581 = ssub.s32 %s16, 2
        // Predicated region
        $region57: #{tpu_custom_call.1} parent=55 // pred_check
          %p582 = pneg %p197
        $region58: #{tpu_custom_call.1} parent=55 // pred_check_branch
          %584 = sbr.rel (%p582) target = $region60
        $region59: #{tpu_custom_call.1} parent=55 // pred_region
          %s585 = sand.u32 %s182, 1
          %s586 = scalar_lea.sflag [#allocation3], %s585
          %s587 = sand.u32 %s182, 1
          %s588 = scalar_lea.vmem [#allocation2], %s587
          %589 = dma.done %s586, 16
        $region60: #{tpu_custom_call.1} parent=55 // pred_fallthru
          _
      $region56: #{tpu_custom_call.1} parent=5 // pred_fallthru
        _
    $region6: #{tpu_custom_call.1} parent=1 // loop_footer
      %s20 = sadd.s32 1, %s16
    $region7: #{tpu_custom_call.1} parent=1 // loop_footer_branch
      %15 = sbr.rel target = $region3
    $region8: #{tpu_custom_call.1} parent=1 // loop_exit
      _
    %590 = vsyncpa [#allocation3], 1
    %s591 = scalar_lea.sflag [#allocation3], 1
    %592 = vsyncpa %s591, 1

</llo_original>
